<compile_context>
chip_gen: v6e
topology: v6e:2x2x1
jax: 0.10.0
libtpu: 0.0.40
codegen_flags: <defaults>
</compile_context>

<pallas_src>
import functools

import jax
import jax.numpy as jnp
from jax.experimental import pallas as pl
from jax.experimental.pallas import tpu as pltpu

THRESHOLD = 1.0


def _neuron_step_kernel(x_ref, ulast_ref, slast_ref, s_ref, u_ref, *, tau, reset):
    x = x_ref[...]
    ulast = ulast_ref[...]
    if reset == "hard":
        u = ulast * (1.0 - slast_ref[...]) / tau + x
    elif reset == "none":
        u = ulast / tau + x
    else:
        raise NotImplementedError(f"{reset} not supported.")
    s_ref[...] = (u >= THRESHOLD).astype(s_ref.dtype)
    u_ref[...] = u.astype(u_ref.dtype)


def _round_up(a, b):
    return -(-a // b) * b


def _round_down(a, b):
    return (a // b) * b


def _pick_lanes(n):
    """Pick a lane width (multiple of 128). Prefer widths needing no padding."""
    candidates = (8192, 4096, 2048, 1024, 512, 256, 128)
    for lanes in candidates:          # exact fit: no pad, >= 8 rows
        if n % (lanes * 8) == 0:
            return lanes
    for lanes in candidates:          # widest width that still yields >= 8 rows
        if n >= lanes * 8:
            return lanes
    return 128


@functools.partial(jax.jit, static_argnames=("tau", "reset"))
def neuron_online_step(x, ulast, slast, *, tau=10.0, reset="hard"):
    """One forward step of neuronOnLine. Returns (s, ulast_new, slast_new)."""
    orig_shape = x.shape
    dtype = x.dtype
    n = int(x.size)
    itemsize = jnp.dtype(dtype).itemsize

    # ---- choose a lane-dense 2-D layout (static, trace-time) ----
    lanes = _pick_lanes(n)
    rows = -(-n // lanes)
    rows_p = _round_up(rows, 8)
    pad = rows_p * lanes - n

    def to_2d(a):
        a = a.reshape(-1)
        if pad:
            a = jnp.pad(a, (0, pad))
        return a.reshape(rows_p, lanes)

    x2, u2, sl2 = to_2d(x), to_2d(ulast), to_2d(slast)

    # ~1 MiB per tile -> 5 streams x 2 buffers ~= 10 MiB of VMEM.
    block_rows = _round_down(max((1 << 20) // (lanes * itemsize), 8), 8)
    block_rows = max(8, min(block_rows, rows_p))
    grid = (pl.cdiv(rows_p, block_rows),)
    spec = pl.BlockSpec((block_rows, lanes), lambda i: (i, 0))

    kernel = functools.partial(_neuron_step_kernel, tau=tau, reset=reset)
    s2, unew2 = pl.pallas_call(
        kernel,
        out_shape=(
            jax.ShapeDtypeStruct((rows_p, lanes), dtype),   # s
            jax.ShapeDtypeStruct((rows_p, lanes), dtype),   # u (new ulast)
        ),
        grid_spec=pltpu.PrefetchScalarGridSpec(
            num_scalar_prefetch=0,
            grid=grid,
            in_specs=[spec, spec, spec],
            out_specs=(spec, spec),
        ),
        input_output_aliases={1: 1, 2: 0},   # ulast -> u_new, slast -> s
        compiler_params=pltpu.CompilerParams(
            dimension_semantics=("parallel",),
            vmem_limit_bytes=32 * 1024 * 1024,
        ),
    )(x2, u2, sl2)

    if pad:
        s = s2.reshape(-1)[:n].reshape(orig_shape)
        u_new = unew2.reshape(-1)[:n].reshape(orig_shape)
    else:
        s = s2.reshape(orig_shape)
        u_new = unew2.reshape(orig_shape)

    # _post_firing: ulast = u, slast = s
    return s, u_new, s


def neuron_online_step_ref(x, ulast, slast, *, tau=10.0, reset="hard"):
    if reset == "hard":
        u = ulast * (1.0 - slast) / tau + x
    else:
        u = ulast / tau + x
    s = (u >= THRESHOLD).astype(x.dtype)
    return s, u, s


if __name__ == "__main__":
    key = jax.random.PRNGKey(0)
    B, C, H, W = 2, 4, 16, 16          # NCHW like the PyTorch module's input
    tau = 10.0

    # Drive a few timesteps through the stateful neuron (module keeps ulast/slast
    # as Python-side state; we thread it explicitly).
    keys = jax.random.split(key, 3)
    xs = [1.5 * jax.random.uniform(k, (B, C, H, W), dtype=jnp.float32) for k in keys]

    ulast = jnp.zeros((B, C, H, W), jnp.float32)   # reset_batch
    slast = jnp.zeros((B, C, H, W), jnp.float32)
    ulast_r, slast_r = ulast, slast

    ok = True
    for x in xs:
        s, ulast, slast = neuron_online_step(x, ulast, slast, tau=tau, reset="hard")
        s = jax.block_until_ready(s)
        ulast = jax.block_until_ready(ulast)
        s_r, ulast_r, slast_r = neuron_online_step_ref(x, ulast_r, slast_r, tau=tau)
        ok &= bool(jnp.allclose(s, s_r))
        ok &= bool(jnp.allclose(ulast, ulast_r, atol=1e-6))
        ok &= bool(jnp.allclose(slast, slast_r))

    if ok:
        print("KERNEL_OK")
    else:
        print("KERNEL_MISMATCH")
</pallas_src>

<mosaic_0001>
module attributes {stable_mosaic.version = 11 : i64} {
  func.func @_neuron_step_kernel(%arg0: i32, %arg1: memref<8x256xf32, #tpu.memory_space<vmem>>, %arg2: memref<8x256xf32, #tpu.memory_space<vmem>>, %arg3: memref<8x256xf32, #tpu.memory_space<vmem>>, %arg4: memref<8x256xf32, #tpu.memory_space<vmem>>, %arg5: memref<8x256xf32, #tpu.memory_space<vmem>>) attributes {dimension_semantics = [#tpu.dimension_semantics<parallel>], iteration_bounds = array<i64: 1>, scalar_prefetch = 0 : i64, scratch_operands = 0 : i64, tpu.core_type = #tpu.core_type<tc>, window_params = [{transform_indices = @transform_0, window_bounds = array<i64: 8, 256>}, {transform_indices = @transform_1, window_bounds = array<i64: 8, 256>}, {transform_indices = @transform_2, window_bounds = array<i64: 8, 256>}, {transform_indices = @transform_3, window_bounds = array<i64: 8, 256>}, {transform_indices = @transform_4, window_bounds = array<i64: 8, 256>}]} {
    %c0 = arith.constant 0 : index
    %c0_0 = arith.constant 0 : index
    %0 = vector.load %arg1[%c0, %c0_0] : memref<8x256xf32, #tpu.memory_space<vmem>>, vector<8x256xf32>
    %c0_1 = arith.constant 0 : index
    %c0_2 = arith.constant 0 : index
    %1 = vector.load %arg2[%c0_1, %c0_2] : memref<8x256xf32, #tpu.memory_space<vmem>>, vector<8x256xf32>
    %c0_3 = arith.constant 0 : index
    %c0_4 = arith.constant 0 : index
    %2 = vector.load %arg3[%c0_3, %c0_4] : memref<8x256xf32, #tpu.memory_space<vmem>>, vector<8x256xf32>
    %cst = arith.constant 1.000000e+00 : f32
    %3 = vector.broadcast %cst : f32 to vector<8x256xf32>
    %4 = arith.subf %3, %2 : vector<8x256xf32>
    %5 = arith.mulf %1, %4 : vector<8x256xf32>
    %cst_5 = arith.constant 1.000000e+01 : f32
    %6 = vector.broadcast %cst_5 : f32 to vector<8x256xf32>
    %7 = arith.divf %5, %6 : vector<8x256xf32>
    %8 = arith.addf %7, %0 : vector<8x256xf32>
    %cst_6 = arith.constant 1.000000e+00 : f32
    %9 = vector.broadcast %cst_6 : f32 to vector<8x256xf32>
    %10 = arith.cmpf oge, %8, %9 : vector<8x256xf32>
    %11 = arith.extui %10 : vector<8x256xi1> to vector<8x256xi32>
    %12 = arith.sitofp %11 : vector<8x256xi32> to vector<8x256xf32>
    %c0_7 = arith.constant 0 : index
    %c0_8 = arith.constant 0 : index
    %13 = vector.load %arg4[%c0_7, %c0_8] : memref<8x256xf32, #tpu.memory_space<vmem>>, vector<8x256xf32>
    tpu.vector_store %arg4[%c0_7, %c0_8], %12 {strides = array<i32>} : memref<8x256xf32, #tpu.memory_space<vmem>>, vector<8x256xf32>,
    %c0_9 = arith.constant 0 : index
    %c0_10 = arith.constant 0 : index
    %14 = vector.load %arg5[%c0_9, %c0_10] : memref<8x256xf32, #tpu.memory_space<vmem>>, vector<8x256xf32>
    tpu.vector_store %arg5[%c0_9, %c0_10], %8 {strides = array<i32>} : memref<8x256xf32, #tpu.memory_space<vmem>>, vector<8x256xf32>,
    return
  }
  func.func @transform_0(%arg0: i32) -> (i32, i32) {
    %c0_i32 = arith.constant 0 : i32
    %c0_i32_0 = arith.constant 0 : i32
    return %arg0, %c0_i32 : i32, i32
  }
  func.func @transform_1(%arg0: i32) -> (i32, i32) {
    %c0_i32 = arith.constant 0 : i32
    %c0_i32_0 = arith.constant 0 : i32
    return %arg0, %c0_i32 : i32, i32
  }
  func.func @transform_2(%arg0: i32) -> (i32, i32) {
    %c0_i32 = arith.constant 0 : i32
    %c0_i32_0 = arith.constant 0 : i32
    return %arg0, %c0_i32 : i32, i32
  }
  func.func @transform_3(%arg0: i32) -> (i32, i32) {
    %c0_i32 = arith.constant 0 : i32
    %c0_i32_0 = arith.constant 0 : i32
    return %arg0, %c0_i32 : i32, i32
  }
  func.func @transform_4(%arg0: i32) -> (i32, i32) {
    %c0_i32 = arith.constant 0 : i32
    %c0_i32_0 = arith.constant 0 : i32
    return %arg0, %c0_i32 : i32, i32
  }
}

</mosaic_0001>

<llo_original>
// kernel: neuron_online_step.1
$region0: #{neuron_online_step.1}
  #allocation0 [shape = 'u32[]', space=smem, size = 0x4, offset = 0x4, fixed_abs, tag = 'smem constant byte address 0x4 - core index']
  #allocation1 [shape = 'u32[144,128]{1,0:T(1,128)}', space=vmem, size = 0x12000, scoped, tag = 'internal scratch']
  %s0 = inlined_call_operand.vmem [shape: f32[8,256], index: 0, kind: input, shape index: {}]
  %s1 = inlined_call_operand.vmem [shape: f32[8,256], index: 1, kind: input, shape index: {}, may-alias: {1,4}]
  %s2 = inlined_call_operand.vmem [shape: f32[8,256], index: 2, kind: input, shape index: {}, may-alias: {2,3}]
  %s3 = inlined_call_operand.vmem [shape: f32[8,256], index: 3, kind: output, shape index: {0}, may-alias: {2,3}]
  %s4 = inlined_call_operand.vmem [shape: f32[8,256], index: 4, kind: output, shape index: {1}, may-alias: {1,4}]
  %5 = xla_tuple %s3, %s4
  %s6 = sld [smem:[#allocation0]]
  $region30: #{neuron_online_step.1} parent=0
    _
  %s8 = ssub.s32 1, %s6
  %s9 = scalar_select 0, %s8, %s6
  // Predicated region
  $region2: #{neuron_online_step.1} parent=0 // pred_check
    _
  $region3: #{neuron_online_step.1} parent=0 // pred_check_branch
    %11 = sbr.rel (0) target = $region5
  $region4: #{neuron_online_step.1} parent=0 // pred_region
    _
  $region5: #{neuron_online_step.1} parent=0 // pred_fallthru
    _
  // Predicated region
  $region6: #{neuron_online_step.1} parent=0 // pred_check
    _
  $region7: #{neuron_online_step.1} parent=0 // pred_check_branch
    %13 = sbr.rel (0) target = $region9
  $region8: #{neuron_online_step.1} parent=0 // pred_region
    _
  $region9: #{neuron_online_step.1} parent=0 // pred_fallthru
    _
  // Predicated region
  $region10: #{neuron_online_step.1} parent=0 // pred_check
    _
  $region11: #{neuron_online_step.1} parent=0 // pred_check_branch
    %15 = sbr.rel (0) target = $region13
  $region12: #{neuron_online_step.1} parent=0 // pred_region
    _
  $region13: #{neuron_online_step.1} parent=0 // pred_fallthru
    _
  %v16 = vld [vmem:[%s0] sm:$0xff]
  %v17 = vld [vmem:[%s0 + $0x8] sm:$0xff]
  %v18 = vld [vmem:[%s1] sm:$0xff]
  %v19 = vld [vmem:[%s1 + $0x8] sm:$0xff]
  %v20 = vld [vmem:[%s2] sm:$0xff]
  %v21 = vld [vmem:[%s2 + $0x8] sm:$0xff]
  %v22 = vsub.f32 1.0, %v20
  %v23 = vsub.f32 1.0, %v21
  %v24 = vmul.f32 %v18, %v22
  %v25 = vmul.f32 %v19, %v23
  %v26 = vrcp.pop 10.0
  %v27 = vmul.f32 %v24, %v26
  %v28 = vmul.f32 %v25, %v26
  %v29 = vadd.f32 %v27, %v16
  %v30 = vadd.f32 %v28, %v17
  %vm31 = vcmp.ge.f32.partialorder %v29, 1.0
  %vm32 = vcmp.ge.f32.partialorder %v30, 1.0
  %v33 = vsel %vm31, 1, 0
  %v34 = vsel %vm32, 1, 0
  %v35 = vcvt.s32.f32 %v33
  %v36 = vcvt.s32.f32 %v34
  %37 = vst [vmem:[%s3] sm:$0xff] %v35
  %38 = vst [vmem:[%s3 + $0x8] sm:$0xff] %v36
  %39 = vst [vmem:[%s4] sm:$0xff] %v29
  %40 = vst [vmem:[%s4 + $0x8] sm:$0xff] %v30
  // Predicated region
  $region14: #{neuron_online_step.1} parent=0 // pred_check
    _
  $region15: #{neuron_online_step.1} parent=0 // pred_check_branch
    %42 = sbr.rel (0) target = $region17
  $region16: #{neuron_online_step.1} parent=0 // pred_region
    _
  $region17: #{neuron_online_step.1} parent=0 // pred_fallthru
    _
  // Predicated region
  $region18: #{neuron_online_step.1} parent=0 // pred_check
    _
  $region19: #{neuron_online_step.1} parent=0 // pred_check_branch
    %44 = sbr.rel (0) target = $region21
  $region20: #{neuron_online_step.1} parent=0 // pred_region
    _
  $region21: #{neuron_online_step.1} parent=0 // pred_fallthru
    _
  // Predicated region
  $region22: #{neuron_online_step.1} parent=0 // pred_check
    _
  $region23: #{neuron_online_step.1} parent=0 // pred_check_branch
    %46 = sbr.rel (0) target = $region25
  $region24: #{neuron_online_step.1} parent=0 // pred_region
    _
  $region25: #{neuron_online_step.1} parent=0 // pred_fallthru
    _
  // Predicated region
  $region26: #{neuron_online_step.1} parent=0 // pred_check
    _
  $region27: #{neuron_online_step.1} parent=0 // pred_check_branch
    %48 = sbr.rel (0) target = $region29
  $region28: #{neuron_online_step.1} parent=0 // pred_region
    _
  $region29: #{neuron_online_step.1} parent=0 // pred_fallthru
    _

</llo_original>
